<compile_context>
chip_gen: v6e
topology: v6e:2x2x1
jax: 0.10.0
libtpu: 0.0.40
codegen_flags: <defaults>
</compile_context>

<pallas_src>
import functools

import jax
import jax.numpy as jnp
from jax import lax
from jax.experimental import pallas as pl
from jax.experimental.pallas import tpu as pltpu

LANE = 128   # vreg lane width


# ---------------------------------------------------------------------------
# Hardware / compiler helpers
# ---------------------------------------------------------------------------
def _vmem_budget_bytes():
    """Usable VMEM budget with headroom (v5e/v6e: 128 MiB, v7x: 64 MiB)."""
    try:
        cap = int(pltpu.get_tpu_info().vmem_capacity_bytes)
    except Exception:            # conservative fallback: smallest generation
        cap = 64 << 20
    return (cap * 7) // 8


def _default_block_bytes():
    """Per-x-block byte target for the streaming (two-pass) kernels.

    ~5.6 MiB on v7x (64 MiB VMEM), ~11 MiB on v5e/v6e (128 MiB): large enough
    that the ~0.35 us fixed per-grid-step cost is negligible vs. DMA time,
    small enough to double-buffer in + out comfortably.
    """
    return int(min(16 << 20, max(2 << 20, _vmem_budget_bytes() // 10)))


def _compiler_params(dims, step_bytes):
    """vmem_limit_bytes sized to the real per-grid-step footprint (2x for
    double buffering) plus headroom, clamped to the hardware budget."""
    limit = min(_vmem_budget_bytes(), max(32 << 20, 2 * step_bytes + (8 << 20)))
    return pltpu.CompilerParams(dimension_semantics=dims,
                                vmem_limit_bytes=limit)


def _choose_spatial_tile(nl, c, item, block_bytes):
    """Rows of 128 lanes per block: a multiple of 8, or the full extent."""
    if nl <= 8:
        return nl
    rows = max(8, (block_bytes // (c * LANE * item)) // 8 * 8)
    return min(nl, rows)


def _choose_channel_tile(c, rows, item, block_bytes):
    """Channels per rescale block (leading dim, not subject to (8,128))."""
    return max(1, min(c, block_bytes // (rows * LANE * item)))


# ---------------------------------------------------------------------------
# In-kernel helpers
# ---------------------------------------------------------------------------
def _channel_mean_max(x_ref):
    """f32 (mean, max) over the channel axis of an x block (1, C, R, 128).

    One channel row is live per iteration (native dtype on the wire, f32
    accumulation) — keeps vreg/VMEM pressure low for large blocks.
    """
    c_total = x_ref.shape[1]
    r0 = x_ref[0, 0].astype(jnp.float32)

    def body(c, carry):
        s, m = carry
        row = x_ref[0, c].astype(jnp.float32)
        return s + row, jnp.maximum(m, row)

    s, m = lax.fori_loop(1, c_total, body, (r0, r0))
    return s * (1.0 / c_total), m


def _masked_softmax_2d(fusion, wh):
    """Exact softmax over the last two axes; lane positions >= wh are padding
    (only possible on the padded fallback path)."""
    nl, lane = fusion.shape[-2], fusion.shape[-1]
    if wh != nl * lane:          # static branch
        r = lax.broadcasted_iota(jnp.int32, fusion.shape, fusion.ndim - 2)
        c = lax.broadcasted_iota(jnp.int32, fusion.shape, fusion.ndim - 1)
        fusion = jnp.where(r * lane + c < wh, fusion, -1e30)
    m = jnp.max(jnp.max(fusion, axis=-1, keepdims=True), axis=-2, keepdims=True)
    e = jnp.exp(fusion - m)      # masked positions: exp(-huge) == 0
    s = jnp.sum(jnp.sum(e, axis=-1, keepdims=True), axis=-2, keepdims=True)
    return e / s                 # exact divide: attention sums to 1


# ---------------------------------------------------------------------------
# Kernels — lane-dense (B, C, nL, 128) layout
# ---------------------------------------------------------------------------
def _single_kernel(x_ref, ct_ref, out_ref, attn_ref, *, wh):
    """Single pass: one whole (C, nL, 128) batch element per grid step."""
    mean_c, max_c = _channel_mean_max(x_ref)
    fusion = (jax.nn.sigmoid(mean_c) + jax.nn.sigmoid(max_c)
              + ct_ref[0].astype(jnp.float32))
    w = _masked_softmax_2d(fusion, wh)
    attn_ref[0] = w.astype(attn_ref.dtype)
    # Re-read the (VMEM-resident) input block per channel so no whole-block
    # value stays live across the softmax.
    @pl.loop(0, x_ref.shape[1])
    def _(c):
        out_ref[0, c] = (x_ref[0, c].astype(jnp.float32) * w).astype(out_ref.dtype)


def _fusion_kernel(x_ref, ct_ref, fus_ref):
    """Two-pass, pass 1: channel mean/max + sigmoids + ct for one W*H tile."""
    mean_c, max_c = _channel_mean_max(x_ref)
    fus_ref[0] = (jax.nn.sigmoid(mean_c) + jax.nn.sigmoid(max_c)
                  + ct_ref[0].astype(jnp.float32))


def _fusion_softmax_kernel(x_ref, ct_ref, attn_ref, *, wh):
    """Two-pass when the whole spatial extent fits one tile: fusion + softmax
    fused into a single pass (skips the standalone softmax launch)."""
    mean_c, max_c = _channel_mean_max(x_ref)
    fusion = (jax.nn.sigmoid(mean_c) + jax.nn.sigmoid(max_c)
              + ct_ref[0].astype(jnp.float32))
    attn_ref[0] = _masked_softmax_2d(fusion, wh).astype(attn_ref.dtype)


def _softmax_kernel(fus_ref, attn_ref, *, wh):
    """Two-pass: global softmax over W*H, several batch elements per step."""
    attn_ref[...] = _masked_softmax_2d(fus_ref[...], wh).astype(attn_ref.dtype)


def _rescale_kernel(x_ref, attn_ref, out_ref):
    """Two-pass, pass 2: out = x * attention on streaming tiles."""
    w = attn_ref[0].astype(jnp.float32)

    @pl.loop(0, x_ref.shape[1])
    def _(c):
        out_ref[0, c] = (x_ref[0, c].astype(jnp.float32) * w).astype(out_ref.dtype)


# ---------------------------------------------------------------------------
# Kernel — flat (B, C, W*H) layout (W*H not a multiple of 128, no padding)
# ---------------------------------------------------------------------------
def _single_kernel_flat(x_ref, ct_ref, out_ref, attn_ref):
    """x_ref/out_ref: (1, C, WH); ct_ref/attn_ref: (1, 1, WH).  Full-extent
    blocks, so no padding or softmax masking is needed."""
    xf = x_ref[0].astype(jnp.float32)                       # (C, WH)
    fusion = (jax.nn.sigmoid(jnp.mean(xf, axis=0, keepdims=True))
              + jax.nn.sigmoid(jnp.max(xf, axis=0, keepdims=True))
              + ct_ref[0].astype(jnp.float32))              # (1, WH)
    z = fusion - jnp.max(fusion, axis=-1, keepdims=True)
    e = jnp.exp(z)
    w = e / jnp.sum(e, axis=-1, keepdims=True)
    attn_ref[0] = w.astype(attn_ref.dtype)
    out_ref[0] = (x_ref[0].astype(jnp.float32) * w).astype(out_ref.dtype)


# ---------------------------------------------------------------------------
# Wrappers
# ---------------------------------------------------------------------------
def _aligned_forward(x4, ct3, *, wh, mode, block_bytes):
    """x4: (B, C, nL, 128) native dtype; ct3: (B, nL, 128)."""
    B, C, nl, _ = x4.shape
    item = x4.dtype.itemsize
    ct_item = ct3.dtype.itemsize
    budget = _vmem_budget_bytes()
    if block_bytes is None:
        block_bytes = _default_block_bytes()

    whp = nl * LANE
    single_step = whp * (2 * C * item + ct_item + item)      # x in+out, ct, attn
    single_fits = 2 * single_step + (16 << 20) <= budget
    if mode == "auto":
        # Single pass reads x exactly once (traffic optimal).  Prefer it
        # whenever it fits, unless B is tiny AND the image is big enough that
        # intra-image tiling buys real pipelining / dual-TC parallelism.
        big_image = C * whp * item > (4 << 20)
        mode = "single" if (single_fits and (B >= 4 or not big_image)) else "two_pass"
    if mode == "single" and not single_fits:
        mode = "two_pass"

    if mode == "single":
        out4, attn3 = pl.pallas_call(
            functools.partial(_single_kernel, wh=wh),
            out_shape=(jax.ShapeDtypeStruct((B, C, nl, LANE), x4.dtype),
                       jax.ShapeDtypeStruct((B, nl, LANE), x4.dtype)),
            grid_spec=pltpu.PrefetchScalarGridSpec(
                num_scalar_prefetch=0, grid=(B,),
                in_specs=[pl.BlockSpec((1, C, nl, LANE), lambda b: (b, 0, 0, 0)),
                          pl.BlockSpec((1, nl, LANE), lambda b: (b, 0, 0))],
                out_specs=[pl.BlockSpec((1, C, nl, LANE), lambda b: (b, 0, 0, 0)),
                           pl.BlockSpec((1, nl, LANE), lambda b: (b, 0, 0))]),
            compiler_params=_compiler_params(("parallel",), single_step),
        )(x4, ct3)
        return out4, attn3

    # ---------------- two-pass ----------------
    tl = _choose_spatial_tile(nl, C, item, block_bytes)
    n_t = pl.cdiv(nl, tl)

    if n_t == 1:
        # Whole spatial extent per step: fuse the softmax into the fusion pass
        # (one less pallas_call + one less HBM round trip of the fusion map).
        fusion_step = nl * LANE * (C * item + ct_item + item)
        attn3 = pl.pallas_call(
            functools.partial(_fusion_softmax_kernel, wh=wh),
            out_shape=jax.ShapeDtypeStruct((B, nl, LANE), x4.dtype),
            grid_spec=pltpu.PrefetchScalarGridSpec(
                num_scalar_prefetch=0, grid=(B,),
                in_specs=[pl.BlockSpec((1, C, nl, LANE), lambda b: (b, 0, 0, 0)),
                          pl.BlockSpec((1, nl, LANE), lambda b: (b, 0, 0))],
                out_specs=pl.BlockSpec((1, nl, LANE), lambda b: (b, 0, 0))),
            compiler_params=_compiler_params(("parallel",), fusion_step),
        )(x4, ct3)
    else:
        # Pass 1: per-tile channel pooling + sigmoid fusion (f32 fusion map).
        fusion_step = tl * LANE * (C * item + ct_item + 4)
        fusion = pl.pallas_call(
            _fusion_kernel,
            out_shape=jax.ShapeDtypeStruct((B, nl, LANE), jnp.float32),
            grid_spec=pltpu.PrefetchScalarGridSpec(
                num_scalar_prefetch=0, grid=(B, n_t),
                in_specs=[pl.BlockSpec((1, C, tl, LANE), lambda b, t: (b, 0, t, 0)),
                          pl.BlockSpec((1, tl, LANE), lambda b, t: (b, t, 0))],
                out_specs=pl.BlockSpec((1, tl, LANE), lambda b, t: (b, t, 0))),
            compiler_params=_compiler_params(("parallel", "parallel"),
                                             fusion_step),
        )(x4, ct3)

        # Global softmax, several batch elements per grid step.
        bt = min(B, 8)
        while B % bt:
            bt -= 1
        attn3 = pl.pallas_call(
            functools.partial(_softmax_kernel, wh=wh),
            out_shape=jax.ShapeDtypeStruct((B, nl, LANE), x4.dtype),
            grid_spec=pltpu.PrefetchScalarGridSpec(
                num_scalar_prefetch=0, grid=(B // bt,),
                in_specs=[pl.BlockSpec((bt, nl, LANE), lambda b: (b, 0, 0))],
                out_specs=pl.BlockSpec((bt, nl, LANE), lambda b: (b, 0, 0))),
            compiler_params=_compiler_params(("parallel",),
                                             bt * nl * LANE * (4 + item)),
        )(fusion)

    # Pass 2: stream x back in and rescale.  Channel axis innermost so the
    # attention tile stays VMEM-resident across the channel loop.
    tc = _choose_channel_tile(C, tl, item, block_bytes)
    n_c = pl.cdiv(C, tc)
    rescale_step = tl * LANE * (2 * tc * item + item)
    # (pipeline_mode=pl.Buffered(3) on the x input is a further v7x tuning
    #  knob if profiling shows exposed DMA at these block sizes.)
    out4 = pl.pallas_call(
        _rescale_kernel,
        out_shape=jax.ShapeDtypeStruct((B, C, nl, LANE), x4.dtype),
        grid_spec=pltpu.PrefetchScalarGridSpec(
            num_scalar_prefetch=0, grid=(B, n_t, n_c),
            in_specs=[pl.BlockSpec((1, tc, tl, LANE), lambda b, t, c: (b, c, t, 0)),
                      pl.BlockSpec((1, tl, LANE), lambda b, t, c: (b, t, 0))],
            out_specs=pl.BlockSpec((1, tc, tl, LANE), lambda b, t, c: (b, c, t, 0))),
        compiler_params=_compiler_params(("parallel",) * 3, rescale_step),
    )(x4, attn3)
    return out4, attn3


def _mixa_forward(x, ct, *, mode, block_bytes):
    B, C, W, H = x.shape
    wh = W * H

    if wh % LANE == 0:
        # Lane-dense view; these reshapes are free (contiguous merges/splits).
        nl = wh // LANE
        x4 = x.reshape(B, C, nl, LANE)
        ct3 = ct.reshape(B, nl, LANE)
        out4, attn3 = _aligned_forward(x4, ct3, wh=wh, mode=mode,
                                       block_bytes=block_bytes)
        return out4.reshape(B, C, W, H), attn3.reshape(B, W, H)

    # W*H not a multiple of 128: use full-extent blocks on the natural length
    # (no wrapper-side pad / slice passes — they each cost a full HBM pass).
    item = x.dtype.itemsize
    flat_step = wh * (2 * C * item + ct.dtype.itemsize + item)
    flat_fits = (2 * flat_step + C * wh * 4 + 8 * wh * 4 + (16 << 20)
                 <= _vmem_budget_bytes())
    if flat_fits and mode != "two_pass":
        x3 = x.reshape(B, C, wh)
        ct3 = ct.reshape(B, 1, wh)
        out3, attn3 = pl.pallas_call(
            _single_kernel_flat,
            out_shape=(jax.ShapeDtypeStruct((B, C, wh), x.dtype),
                       jax.ShapeDtypeStruct((B, 1, wh), x.dtype)),
            grid_spec=pltpu.PrefetchScalarGridSpec(
                num_scalar_prefetch=0, grid=(B,),
                in_specs=[pl.BlockSpec((1, C, wh), lambda b: (b, 0, 0)),
                          pl.BlockSpec((1, 1, wh), lambda b: (b, 0, 0))],
                out_specs=[pl.BlockSpec((1, C, wh), lambda b: (b, 0, 0)),
                           pl.BlockSpec((1, 1, wh), lambda b: (b, 0, 0))]),
            compiler_params=_compiler_params(("parallel",), flat_step),
        )(x3, ct3)
        return out3.reshape(B, C, W, H), attn3.reshape(B, W, H)

    # Rare fallback (huge non-128-aligned image or explicit two_pass request):
    # pad the spatial axis to 128 lanes (costs one extra pad + slice pass).
    # TODO(synk): a fully in-kernel ragged two-pass (BoundedSlice tail) would
    # remove these two extra passes as well.
    nl = pl.cdiv(wh, LANE)
    whp = nl * LANE
    xp = jnp.pad(x.reshape(B, C, wh), ((0, 0), (0, 0), (0, whp - wh)))
    ctp = jnp.pad(ct.reshape(B, wh), ((0, 0), (0, whp - wh)))
    out4, attn3 = _aligned_forward(xp.reshape(B, C, nl, LANE),
                                   ctp.reshape(B, nl, LANE),
                                   wh=wh, mode=mode, block_bytes=block_bytes)
    out = out4.reshape(B, C, whp)[:, :, :wh].reshape(B, C, W, H)
    attn = attn3.reshape(B, whp)[:, :wh].reshape(B, W, H)
    return out, attn


@functools.partial(jax.jit, static_argnames=("mode", "block_bytes"))
def mixa_module(x, ct, mode="auto", block_bytes=None):
    """x: (B, C, W, H), ct: (B, W, H) -> (output, attention_weight)."""
    return _mixa_forward(x, ct, mode=mode, block_bytes=block_bytes)


# ---------------------------------------------------------------------------
# Pure-JAX reference (mirrors the PyTorch forward) and self-test
# ---------------------------------------------------------------------------
def _reference(x, ct):
    B, C, W, H = x.shape
    b_c_wh = x.reshape(B, C, W * H)
    b_wh_c = jnp.transpose(b_c_wh, (0, 2, 1))
    avg = jax.nn.sigmoid(jnp.mean(b_wh_c, axis=-1)).reshape(B, W, H)
    mx = jax.nn.sigmoid(jnp.max(b_wh_c, axis=-1)).reshape(B, W, H)
    fusion = avg + mx + ct
    attn = jax.nn.softmax(fusion.reshape(B, -1), axis=-1).reshape(B, W, H)
    out = x * attn[:, None, :, :]
    return out, attn


if __name__ == "__main__":
    # MixA_Module has no learnable parameters (pools + softmax only).
    key = jax.random.PRNGKey(0)
    ks = jax.random.split(key, 8)

    # Case 1: aligned W*H (16*16 = 256): exercises single and two_pass(fused).
    x1 = jax.random.normal(ks[0], (2, 4, 16, 16), dtype=jnp.float32)
    ct1 = jax.random.normal(ks[1], (2, 16, 16), dtype=jnp.float32)

    # Case 2: ragged W*H (10*10 = 100): full-extent flat kernel, no padding.
    x2 = jax.random.normal(ks[2], (2, 3, 10, 10), dtype=jnp.float32)
    ct2 = jax.random.normal(ks[3], (2, 10, 10), dtype=jnp.float32)

    # Case 3: aligned, small block_bytes forced to exercise the tiled two-pass
    # path (separate fusion / batched softmax / rescale kernels, n_t > 1).
    x3 = jax.random.normal(ks[4], (2, 4, 32, 64), dtype=jnp.float32)
    ct3 = jax.random.normal(ks[5], (2, 32, 64), dtype=jnp.float32)

    # Case 4: bf16 on the wire (native-dtype streaming, f32 math in-kernel).
    x4 = jax.random.normal(ks[6], (2, 4, 16, 16), dtype=jnp.bfloat16)
    ct4 = jax.random.normal(ks[7], (2, 16, 16), dtype=jnp.bfloat16)

    def check(x, ct, out, attn, tol, tag):
        ref_out, ref_attn = _reference(x.astype(jnp.float32),
                                       ct.astype(jnp.float32))
        assert out.shape == x.shape and attn.shape == ct.shape, tag
        assert out.dtype == x.dtype and attn.dtype == x.dtype, tag
        assert jnp.allclose(out.astype(jnp.float32), ref_out, **tol), (tag, "out")
        assert jnp.allclose(attn.astype(jnp.float32), ref_attn, **tol), (tag, "attn")

    tight = dict(atol=1e-4, rtol=1e-4)   # softmax is exact now
    loose = dict(atol=5e-3, rtol=5e-2)   # bf16 output representation

    for mode in ("auto", "single", "two_pass"):
        out, attn = mixa_module(x1, ct1, mode=mode)
        jax.block_until_ready((out, attn))
        check(x1, ct1, out, attn, tight, ("case1", mode))

    out, attn = mixa_module(x2, ct2)
    jax.block_until_ready((out, attn))
    check(x2, ct2, out, attn, tight, "case2")

    out, attn = mixa_module(x3, ct3, mode="two_pass", block_bytes=16 * 1024)
    jax.block_until_ready((out, attn))
    check(x3, ct3, out, attn, tight, "case3")

    out, attn = mixa_module(x4, ct4)
    jax.block_until_ready((out, attn))
    check(x4, ct4, out, attn, loose, "case4")

    print("KERNEL_OK")
</pallas_src>

<mosaic_0001>
module attributes {stable_mosaic.version = 11 : i64} {
  func.func @_single_kernel(%arg0: i32, %arg1: memref<1x4x2x128xf32, #tpu.memory_space<vmem>>, %arg2: memref<1x2x128xf32, #tpu.memory_space<vmem>>, %arg3: memref<1x4x2x128xf32, #tpu.memory_space<vmem>>, %arg4: memref<1x2x128xf32, #tpu.memory_space<vmem>>) attributes {dimension_semantics = [#tpu.dimension_semantics<parallel>], iteration_bounds = array<i64: 2>, scalar_prefetch = 0 : i64, scratch_operands = 0 : i64, tpu.core_type = #tpu.core_type<tc>, window_params = [{transform_indices = @transform_0, window_bounds = array<i64: 1, 4, 2, 128>}, {transform_indices = @transform_1, window_bounds = array<i64: 1, 2, 128>}, {transform_indices = @transform_2, window_bounds = array<i64: 1, 4, 2, 128>}, {transform_indices = @transform_3, window_bounds = array<i64: 1, 2, 128>}]} {
    %c0 = arith.constant 0 : index
    %c0_0 = arith.constant 0 : index
    %c0_1 = arith.constant 0 : index
    %c0_2 = arith.constant 0 : index
    %0 = vector.load %arg1[%c0, %c0_0, %c0_1, %c0_2] : memref<1x4x2x128xf32, #tpu.memory_space<vmem>>, vector<1x1x2x128xf32>
    %1 = vector.shape_cast %0 : vector<1x1x2x128xf32> to vector<2x128xf32>
    %c1_i32 = arith.constant 1 : i32
    %c3_i32 = arith.constant 3 : i32
    %2 = arith.addi %c1_i32, %c3_i32 : i32
    %c1_i32_3 = arith.constant 1 : i32
    %3:2 = scf.for %arg5 = %c1_i32 to %2 step %c1_i32_3 iter_args(%arg6 = %1, %arg7 = %1) -> (vector<2x128xf32>, vector<2x128xf32>)  : i32 {
      %c0_19 = arith.constant 0 : index
      %37 = arith.index_cast %arg5 : i32 to index
      %c0_20 = arith.constant 0 : index
      %c0_21 = arith.constant 0 : index
      %38 = vector.load %arg1[%c0_19, %37, %c0_20, %c0_21] : memref<1x4x2x128xf32, #tpu.memory_space<vmem>>, vector<1x1x2x128xf32>
      %39 = vector.shape_cast %38 : vector<1x1x2x128xf32> to vector<2x128xf32>
      %40 = arith.addf %arg6, %39 : vector<2x128xf32>
      %41 = arith.maximumf %arg7, %39 : vector<2x128xf32>
      scf.yield %40, %41 : vector<2x128xf32>, vector<2x128xf32>
    }
    %c3_i32_4 = arith.constant 3 : i32
    %cst = arith.constant 2.500000e-01 : f32
    %4 = vector.broadcast %cst : f32 to vector<2x128xf32>
    %5 = arith.mulf %3#0, %4 : vector<2x128xf32>
    %6 = arith.negf %5 : vector<2x128xf32>
    %7 = math.exp %6 : vector<2x128xf32>
    %cst_5 = arith.constant 1.000000e+00 : f32
    %8 = vector.broadcast %cst_5 : f32 to vector<2x128xf32>
    %9 = arith.addf %8, %7 : vector<2x128xf32>
    %10 = arith.divf %8, %9 : vector<2x128xf32>
    %11 = arith.negf %3#1 : vector<2x128xf32>
    %12 = math.exp %11 : vector<2x128xf32>
    %cst_6 = arith.constant 1.000000e+00 : f32
    %13 = vector.broadcast %cst_6 : f32 to vector<2x128xf32>
    %14 = arith.addf %13, %12 : vector<2x128xf32>
    %15 = arith.divf %13, %14 : vector<2x128xf32>
    %16 = arith.addf %10, %15 : vector<2x128xf32>
    %c0_7 = arith.constant 0 : index
    %c0_8 = arith.constant 0 : index
    %c0_9 = arith.constant 0 : index
    %17 = vector.load %arg2[%c0_7, %c0_8, %c0_9] : memref<1x2x128xf32, #tpu.memory_space<vmem>>, vector<1x2x128xf32>
    %18 = vector.shape_cast %17 : vector<1x2x128xf32> to vector<2x128xf32>
    %19 = arith.addf %16, %18 : vector<2x128xf32>
    %cst_10 = arith.constant dense<0xFF800000> : vector<2xf32>
    %20 = vector.multi_reduction <maximumf>, %19, %cst_10 [1] : vector<2x128xf32> to vector<2xf32>
    %21 = vector.shape_cast %20 : vector<2xf32> to vector<2x1xf32>
    %cst_11 = arith.constant dense<0xFF800000> : vector<1xf32>
    %22 = vector.multi_reduction <maximumf>, %21, %cst_11 [0] : vector<2x1xf32> to vector<1xf32>
    %23 = vector.shape_cast %22 : vector<1xf32> to vector<1x1xf32>
    %24 = vector.broadcast %23 : vector<1x1xf32> to vector<2x128xf32>
    %25 = arith.subf %19, %24 : vector<2x128xf32>
    %26 = math.exp %25 : vector<2x128xf32>
    %cst_12 = arith.constant dense<0.000000e+00> : vector<2xf32>
    %27 = vector.multi_reduction <add>, %26, %cst_12 [1] : vector<2x128xf32> to vector<2xf32>
    %28 = vector.shape_cast %27 : vector<2xf32> to vector<2x1xf32>
    %cst_13 = arith.constant dense<0.000000e+00> : vector<1xf32>
    %29 = vector.multi_reduction <add>, %28, %cst_13 [0] : vector<2x1xf32> to vector<1xf32>
    %30 = vector.shape_cast %29 : vector<1xf32> to vector<1x1xf32>
    %31 = vector.broadcast %30 : vector<1x1xf32> to vector<2x128xf32>
    %32 = arith.divf %26, %31 : vector<2x128xf32>
    %c0_14 = arith.constant 0 : index
    %c0_15 = arith.constant 0 : index
    %c0_16 = arith.constant 0 : index
    %33 = vector.load %arg4[%c0_14, %c0_15, %c0_16] : memref<1x2x128xf32, #tpu.memory_space<vmem>>, vector<1x2x128xf32>
    %34 = vector.shape_cast %33 : vector<1x2x128xf32> to vector<2x128xf32>
    %35 = vector.shape_cast %32 : vector<2x128xf32> to vector<1x2x128xf32>
    tpu.vector_store %arg4[%c0_14, %c0_15, %c0_16], %35 {strides = array<i32>} : memref<1x2x128xf32, #tpu.memory_space<vmem>>, vector<1x2x128xf32>,
    %c0_i32 = arith.constant 0 : i32
    %c4_i32 = arith.constant 4 : i32
    %36 = arith.addi %c0_i32, %c4_i32 : i32
    %c1_i32_17 = arith.constant 1 : i32
    scf.for %arg5 = %c0_i32 to %36 step %c1_i32_17  : i32 {
      %c1_i32_19 = arith.constant 1 : i32
      %37 = arith.muli %arg5, %c1_i32_19 : i32
      %c0_i32_20 = arith.constant 0 : i32
      %38 = arith.addi %c0_i32_20, %37 : i32
      %c0_21 = arith.constant 0 : index
      %39 = arith.index_cast %38 : i32 to index
      %c0_22 = arith.constant 0 : index
      %c0_23 = arith.constant 0 : index
      %40 = vector.load %arg1[%c0_21, %39, %c0_22, %c0_23] : memref<1x4x2x128xf32, #tpu.memory_space<vmem>>, vector<1x1x2x128xf32>
      %41 = vector.shape_cast %40 : vector<1x1x2x128xf32> to vector<2x128xf32>
      %42 = arith.mulf %41, %32 : vector<2x128xf32>
      %c0_24 = arith.constant 0 : index
      %43 = arith.index_cast %38 : i32 to index
      %c0_25 = arith.constant 0 : index
      %c0_26 = arith.constant 0 : index
      %44 = vector.load %arg3[%c0_24, %43, %c0_25, %c0_26] : memref<1x4x2x128xf32, #tpu.memory_space<vmem>>, vector<1x1x2x128xf32>
      %45 = vector.shape_cast %44 : vector<1x1x2x128xf32> to vector<2x128xf32>
      %46 = vector.shape_cast %42 : vector<2x128xf32> to vector<1x1x2x128xf32>
      tpu.vector_store %arg3[%c0_24, %43, %c0_25, %c0_26], %46 {strides = array<i32>} : memref<1x4x2x128xf32, #tpu.memory_space<vmem>>, vector<1x1x2x128xf32>,
    }
    %c4_i32_18 = arith.constant 4 : i32
    return
  }
  func.func @transform_0(%arg0: i32) -> (i32, i32, i32, i32) {
    %c0_i32 = arith.constant 0 : i32
    %c0_i32_0 = arith.constant 0 : i32
    %c0_i32_1 = arith.constant 0 : i32
    %c0_i32_2 = arith.constant 0 : i32
    return %arg0, %c0_i32, %c0_i32_0, %c0_i32_1 : i32, i32, i32, i32
  }
  func.func @transform_1(%arg0: i32) -> (i32, i32, i32) {
    %c0_i32 = arith.constant 0 : i32
    %c0_i32_0 = arith.constant 0 : i32
    %c0_i32_1 = arith.constant 0 : i32
    return %arg0, %c0_i32, %c0_i32_0 : i32, i32, i32
  }
  func.func @transform_2(%arg0: i32) -> (i32, i32, i32, i32) {
    %c0_i32 = arith.constant 0 : i32
    %c0_i32_0 = arith.constant 0 : i32
    %c0_i32_1 = arith.constant 0 : i32
    %c0_i32_2 = arith.constant 0 : i32
    return %arg0, %c0_i32, %c0_i32_0, %c0_i32_1 : i32, i32, i32, i32
  }
  func.func @transform_3(%arg0: i32) -> (i32, i32, i32) {
    %c0_i32 = arith.constant 0 : i32
    %c0_i32_0 = arith.constant 0 : i32
    %c0_i32_1 = arith.constant 0 : i32
    return %arg0, %c0_i32, %c0_i32_0 : i32, i32, i32
  }
}

</mosaic_0001>

<llo_original>
// kernel: mixa_module.1
$region0: #{mixa_module.1}
  #allocation0 [shape = 'u32[]', space=smem, size = 0x4, offset = 0x4, fixed_abs, tag = 'smem constant byte address 0x4 - core index']
  #allocation1 [shape = 'u32[144,128]{1,0:T(1,128)}', space=vmem, size = 0x12000, scoped, tag = 'internal scratch']
  %s0 = inlined_call_operand.vmem [shape: f32[2,4,2,128], index: 0, kind: input, shape index: {}]
  %s1 = inlined_call_operand.vmem [shape: f32[2,2,128], index: 1, kind: input, shape index: {}]
  %s2 = inlined_call_operand.vmem [shape: f32[2,4,2,128], index: 2, kind: output, shape index: {0}]
  %s3 = inlined_call_operand.vmem [shape: f32[2,2,128], index: 3, kind: output, shape index: {1}]
  %4 = xla_tuple %s2, %s3
  %s5 = sld [smem:[#allocation0]]
  $region63: #{mixa_module.1} parent=0
    _
  %s7 = ssub.s32 1, %s5
  %s8 = scalar_select 0, %s7, %s5
  loop: start=0, step=1, limit=4
  $region2: #{mixa_module.1} parent=0 // loop_pre_header
    _
  $region3: #{mixa_module.1} parent=0 // loop_header
    %s10 = sphi 0, %s14
    %p11 = scmp.ge.s32.totalorder %s10, 4
    %s20 = sphi 0, %s22
    %s23 = sphi 0, %s20
    %s24 = sphi 0, %s23
    %s40 = sphi 0, %s24
    %s46 = sphi 0, %s48
    %s49 = sphi 0, %s46
    %s50 = sphi 0, %s49
    %s66 = sphi 0, %s50
    %s72 = sphi 0, %s74
    %s75 = sphi 0, %s72
    %s76 = sphi 0, %s75
    %s92 = sphi 0, %s76
    %s98 = sphi 0, %s100
    %s101 = sphi 0, %s98
    %s102 = sphi 0, %s101
    %s118 = sphi 0, %s102
  $region4: #{mixa_module.1} parent=0 // loop_header_branch
    %13 = sbr.rel (%p11) target = $region8
  $region5: #{mixa_module.1} parent=0 // loop_body
    %s15 = ssub.s32 %s10, 1
    %s16 = ssub.s32 %s10, 2
    %s17 = sadd.s32 %s10, 1
    %s18 = ssub.s32 %s10, %s17
    %p19 = scmp.eq.s32.totalorder %s18, 0
    %s21 = sadd.s32 %s20, 1
    %s22 = scalar_select %p19, %s20, %s21
    %p25 = pneg %p19
    %p26 = scmp.eq.s32.totalorder %s10, 1
    %p27 = por %p25, %p26
    %p28 = scmp.ne.s32.totalorder %s20, %s23
    %p29 = scmp.eq.s32.totalorder %s10, 0
    %p30 = por %p28, %p29
    %p31 = scmp.ne.s32.totalorder %s20, %s23
    %p32 = scmp.eq.s32.totalorder %s15, 1
    %p33 = por %p31, %p32
    %p34 = scmp.ne.s32.totalorder %s23, %s24
    %p35 = scmp.eq.s32.totalorder %s15, 0
    %p36 = por %p34, %p35
    %p37 = scmp.ne.s32.totalorder %s23, %s24
    %p38 = scmp.eq.s32.totalorder %s16, 1
    %p39 = por %p37, %p38
    %p41 = scmp.ne.s32.totalorder %s24, %s40
    %p42 = scmp.eq.s32.totalorder %s16, 0
    %p43 = por %p41, %p42
    %s44 = ssub.s32 %s10, %s17
    %p45 = scmp.eq.s32.totalorder %s44, 0
    %s47 = sadd.s32 %s46, 1
    %s48 = scalar_select %p45, %s46, %s47
    %p51 = pneg %p45
    %p52 = scmp.eq.s32.totalorder %s10, 1
    %p53 = por %p51, %p52
    %p54 = scmp.ne.s32.totalorder %s46, %s49
    %p55 = scmp.eq.s32.totalorder %s10, 0
    %p56 = por %p54, %p55
    %p57 = scmp.ne.s32.totalorder %s46, %s49
    %p58 = scmp.eq.s32.totalorder %s15, 1
    %p59 = por %p57, %p58
    %p60 = scmp.ne.s32.totalorder %s49, %s50
    %p61 = scmp.eq.s32.totalorder %s15, 0
    %p62 = por %p60, %p61
    %p63 = scmp.ne.s32.totalorder %s49, %s50
    %p64 = scmp.eq.s32.totalorder %s16, 1
    %p65 = por %p63, %p64
    %p67 = scmp.ne.s32.totalorder %s50, %s66
    %p68 = scmp.eq.s32.totalorder %s16, 0
    %p69 = por %p67, %p68
    %s70 = ssub.s32 %s10, %s17
    %p71 = scmp.eq.s32.totalorder %s70, 0
    %s73 = sadd.s32 %s72, 1
    %s74 = scalar_select %p71, %s72, %s73
    %p77 = pneg %p71
    %p78 = scmp.eq.s32.totalorder %s10, 1
    %p79 = por %p77, %p78
    %p80 = scmp.ne.s32.totalorder %s72, %s75
    %p81 = scmp.eq.s32.totalorder %s10, 0
    %p82 = por %p80, %p81
    %p83 = scmp.ne.s32.totalorder %s72, %s75
    %p84 = scmp.eq.s32.totalorder %s15, 1
    %p85 = por %p83, %p84
    %p86 = scmp.ne.s32.totalorder %s75, %s76
    %p87 = scmp.eq.s32.totalorder %s15, 0
    %p88 = por %p86, %p87
    %p89 = scmp.ne.s32.totalorder %s75, %s76
    %p90 = scmp.eq.s32.totalorder %s16, 1
    %p91 = por %p89, %p90
    %p93 = scmp.ne.s32.totalorder %s76, %s92
    %p94 = scmp.eq.s32.totalorder %s16, 0
    %p95 = por %p93, %p94
    %s96 = ssub.s32 %s10, %s17
    %p97 = scmp.eq.s32.totalorder %s96, 0
    %s99 = sadd.s32 %s98, 1
    %s100 = scalar_select %p97, %s98, %s99
    %p103 = pneg %p97
    %p104 = scmp.eq.s32.totalorder %s10, 1
    %p105 = por %p103, %p104
    %p106 = scmp.ne.s32.totalorder %s98, %s101
    %p107 = scmp.eq.s32.totalorder %s10, 0
    %p108 = por %p106, %p107
    %p109 = scmp.ne.s32.totalorder %s98, %s101
    %p110 = scmp.eq.s32.totalorder %s15, 1
    %p111 = por %p109, %p110
    %p112 = scmp.ne.s32.totalorder %s101, %s102
    %p113 = scmp.eq.s32.totalorder %s15, 0
    %p114 = por %p112, %p113
    %p115 = scmp.ne.s32.totalorder %s101, %s102
    %p116 = scmp.eq.s32.totalorder %s16, 1
    %p117 = por %p115, %p116
    %p119 = scmp.ne.s32.totalorder %s102, %s118
    %p120 = scmp.eq.s32.totalorder %s16, 0
    %p121 = por %p119, %p120
    %p122 = scmp.le.s32.totalorder 1, %s10
    %p123 = scmp.lt.s32.totalorder %s10, 3
    %p124 = pnand %p122, %p123
    %p125 = pneg %p124
    // Predicated region
    $region9: #{mixa_module.1} parent=5 // pred_check
      _
    $region10: #{mixa_module.1} parent=5 // pred_check_branch
      %127 = sbr.rel (%p124) target = $region12
    $region11: #{mixa_module.1} parent=5 // pred_region
      %s128 = ssub.s32 %s10, 1
    $region12: #{mixa_module.1} parent=5 // pred_fallthru
      _
    %p129 = scmp.lt.s32.totalorder %s10, 2
    // Predicated region
    $region13: #{mixa_module.1} parent=5 // pred_check
      %p130 = pneg %p129
    $region14: #{mixa_module.1} parent=5 // pred_check_branch
      %132 = sbr.rel (%p130) target = $region16
    $region15: #{mixa_module.1} parent=5 // pred_region
      // Predicated region
      $region17: #{mixa_module.1} parent=15 // pred_check
        %p133 = pneg %p30
      $region18: #{mixa_module.1} parent=15 // pred_check_branch
        %135 = sbr.rel (%p133) target = $region20
      $region19: #{mixa_module.1} parent=15 // pred_region
        %p136 = scmp.lt.s32.totalorder %s10, 1
        %s137 = scalar_select %p136, %s10, 1
        %s138 = smul.addr %s137, 4
        %s139 = smul.addr %s138, 2
        %s140 = scalar_lea.vmem %s0, %s139
      $region20: #{mixa_module.1} parent=15 // pred_fallthru
        _
      // Predicated region
      $region21: #{mixa_module.1} parent=15 // pred_check
        %p141 = pneg %p56
      $region22: #{mixa_module.1} parent=15 // pred_check_branch
        %143 = sbr.rel (%p141) target = $region24
      $region23: #{mixa_module.1} parent=15 // pred_region
        %p144 = scmp.lt.s32.totalorder %s10, 1
        %s145 = scalar_select %p144, %s10, 1
        %s146 = smul.addr %s145, 2
        %s147 = scalar_lea.vmem %s1, %s146
      $region24: #{mixa_module.1} parent=15 // pred_fallthru
        _
    $region16: #{mixa_module.1} parent=5 // pred_fallthru
      _
    %p148 = scmp.le.s32.totalorder 1, %s10
    %p149 = scmp.lt.s32.totalorder %s10, 3
    %p150 = pnand %p148, %p149
    %p151 = pneg %p150
    // Predicated region
    $region25: #{mixa_module.1} parent=5 // pred_check
      _
    $region26: #{mixa_module.1} parent=5 // pred_check_branch
      %153 = sbr.rel (%p150) target = $region28
    $region27: #{mixa_module.1} parent=5 // pred_region
      %s154 = ssub.s32 %s10, 1
      %p155 = scmp.lt.s32.totalorder %s15, 1
      %s156 = scalar_select %p155, %s15, 1
      %s157 = smul.addr %s156, 4
      %s158 = smul.addr %s157, 2
      %s159 = scalar_lea.vmem %s0, %s158
      %p160 = pneg %p36
      %p161 = pneg %p33
      %p162 = scmp.lt.s32.totalorder %s15, 1
      %s163 = scalar_select %p162, %s15, 1
      %s164 = smul.addr %s163, 2
      %s165 = scalar_lea.vmem %s1, %s164
      %p166 = pneg %p62
      %p167 = pneg %p59
      %p168 = pneg %p88
      %p169 = pneg %p85
      %p170 = scmp.lt.s32.totalorder %s15, 1
      %s171 = scalar_select %p170, %s15, 1
      %s172 = smul.addr %s171, 4
      %s173 = smul.addr %s172, 2
      %s174 = scalar_lea.vmem %s2, %s173
      %p175 = pneg %p114
      %p176 = pneg %p111
      %p177 = scmp.lt.s32.totalorder %s15, 1
      %s178 = scalar_select %p177, %s15, 1
      %s179 = smul.addr %s178, 2
      %s180 = scalar_lea.vmem %s3, %s179
      %p181 = scmp.lt.s32.totalorder %s15, 1
      %s182 = scalar_select %p181, %s15, 1
      %s183 = smul.addr %s182, 4
      %s184 = smul.addr %s183, 2
      %s185 = scalar_lea.vmem %s0, %s184
      %p186 = scmp.lt.s32.totalorder %s15, 1
      %s187 = scalar_select %p186, %s15, 1
      %s188 = smul.addr %s187, 2
      %s189 = scalar_lea.vmem %s1, %s188
      %p190 = scmp.lt.s32.totalorder %s15, 1
      %s191 = scalar_select %p190, %s15, 1
      %s192 = smul.addr %s191, 4
      %s193 = smul.addr %s192, 2
      %s194 = scalar_lea.vmem %s2, %s193
      %p195 = scmp.lt.s32.totalorder %s15, 1
      %s196 = scalar_select %p195, %s15, 1
      %s197 = smul.addr %s196, 2
      %s198 = scalar_lea.vmem %s3, %s197
      %v199 = vld [vmem:[%s185] sm:$0x3]
      loop: start=1, step=1, limit=4
      $region29: #{mixa_module.1} parent=27 // loop_pre_header
        _
      $region30: #{mixa_module.1} parent=27 // loop_header
        %s201 = sphi 1, %s205
        %p202 = scmp.ge.s32.totalorder %s201, 4
        %v206 = vphi %v199, %v211
        %v207 = vphi %v199, %v212
      $region31: #{mixa_module.1} parent=27 // loop_header_branch
        %204 = sbr.rel (%p202) target = $region35
      $region32: #{mixa_module.1} parent=27 // loop_body
        %s208 = smul.u32 %s201, 2
        %s209 = scalar_lea.vmem %s185, %s208
        %v210 = vld [vmem:[%s209] sm:$0x3]
        %v211 = vadd.f32 %v206, %v210
        %v212 = vmax.f32 %v207, %v210
      $region33: #{mixa_module.1} parent=27 // loop_footer
        %s205 = sadd.s32 1, %s201
      $region34: #{mixa_module.1} parent=27 // loop_footer_branch
        %200 = sbr.rel target = $region30
      $region35: #{mixa_module.1} parent=27 // loop_exit
        _
      %v213 = vmul.f32 %v206, 0.25
      %v214 = vxor.u32 %v213, 2147483648
      %v215 = vmul.f32 %v214, 1.442695
      %v216 = vpow.pop %v215
      %v217 = vadd.f32 %v216, 1.0
      %v218 = vrcp.pop %v217
      %v219 = vmul.f32 1.0, %v218
      %v220 = vxor.u32 %v207, 2147483648
      %v221 = vmul.f32 %v220, 1.442695
      %v222 = vpow.pop %v221
      %v223 = vadd.f32 %v222, 1.0
      %v224 = vrcp.pop %v223
      %v225 = vmul.f32 1.0, %v224
      %v226 = vadd.f32 %v219, %v225
      %v227 = vld [vmem:[%s189] sm:$0x3]
      %v228 = vadd.f32 %v226, %v227
      %vm229 = vcmask 1041408
      %v230 = vsel %vm229, %v228, -inf
      %231 = vmax.xlane.f32.xlu0 %v230
      %v232 = vpop.xlane.xlu0 %231
      %v233 = vsel %vm229, %v232, -inf
      %v234 = vrot.slane %v233, 4
      %v235 = vmax.f32 %v233, %v234
      %v236 = vrot.slane %v235, 2
      %v237 = vmax.f32 %v235, %v236
      %v238 = vrot.slane %v237, 1
      %v239 = vmax.f32 %v237, %v238
      %v240 = vsub.f32 %v228, %v239
      %v241 = vmul.f32 %v240, 1.442695
      %v242 = vpow.pop %v241
      %v243 = vsel %vm229, %v242, 0.0
      %244 = vadd.xlane.f32.xlu0 %v243
      %v245 = vpop.xlane.xlu0 %244
      %v246 = vsel %vm229, %v245, 0.0
      %v247 = vrot.slane %v246, 4
      %v248 = vadd.f32 %v246, %v247
      %v249 = vrot.slane %v248, 2
      %v250 = vadd.f32 %v248, %v249
      %v251 = vrot.slane %v250, 1
      %v252 = vadd.f32 %v250, %v251
      %v253 = vrcp.pop %v252
      %v254 = vmul.f32 %v242, %v253
      %255 = vst [vmem:[%s198] sm:$0x3] %v254
      loop: start=0, step=1, limit=4
      $region36: #{mixa_module.1} parent=27 // loop_pre_header
        _
      $region37: #{mixa_module.1} parent=27 // loop_header
        %s257 = sphi 0, %s261
        %p258 = scmp.ge.s32.totalorder %s257, 4
      $region38: #{mixa_module.1} parent=27 // loop_header_branch
        %260 = sbr.rel (%p258) target = $region42
      $region39: #{mixa_module.1} parent=27 // loop_body
        %s262 = smul.u32 %s257, 2
        %s263 = scalar_lea.vmem %s185, %s262
        %v264 = vld [vmem:[%s263] sm:$0x3]
        %v265 = vmul.f32 %v264, %v254
        %s266 = scalar_lea.vmem %s194, %s262
        %267 = vst [vmem:[%s266] sm:$0x3] %v265
      $region40: #{mixa_module.1} parent=27 // loop_footer
        %s261 = sadd.s32 1, %s257
      $region41: #{mixa_module.1} parent=27 // loop_footer_branch
        %256 = sbr.rel target = $region37
      $region42: #{mixa_module.1} parent=27 // loop_exit
        _
      %p268 = scmp.lt.s32.totalorder %s15, 1
      %s269 = scalar_select %p268, %s15, 1
      %s270 = smul.addr %s269, 4
      %s271 = smul.addr %s270, 2
      %s272 = scalar_lea.vmem %s2, %s271
      %p273 = scmp.lt.s32.totalorder %s15, 1
      %s274 = scalar_select %p273, %s15, 1
      %s275 = smul.addr %s274, 2
      %s276 = scalar_lea.vmem %s3, %s275
      // Predicated region
      $region43: #{mixa_module.1} parent=27 // pred_check
        %p277 = pneg %p85
      $region44: #{mixa_module.1} parent=27 // pred_check_branch
        %279 = sbr.rel (%p277) target = $region46
      $region45: #{mixa_module.1} parent=27 // pred_region
        _
      $region46: #{mixa_module.1} parent=27 // pred_fallthru
        _
      // Predicated region
      $region47: #{mixa_module.1} parent=27 // pred_check
        %p280 = pneg %p111
      $region48: #{mixa_module.1} parent=27 // pred_check_branch
        %282 = sbr.rel (%p280) target = $region50
      $region49: #{mixa_module.1} parent=27 // pred_region
        _
      $region50: #{mixa_module.1} parent=27 // pred_fallthru
        _
    $region28: #{mixa_module.1} parent=5 // pred_fallthru
      _
    %p283 = scmp.le.s32.totalorder 2, %s10
    // Predicated region
    $region51: #{mixa_module.1} parent=5 // pred_check
      %p284 = pneg %p283
    $region52: #{mixa_module.1} parent=5 // pred_check_branch
      %286 = sbr.rel (%p284) target = $region54
    $region53: #{mixa_module.1} parent=5 // pred_region
      %s287 = ssub.s32 %s10, 2
      // Predicated region
      $region55: #{mixa_module.1} parent=53 // pred_check
        %p288 = pneg %p91
      $region56: #{mixa_module.1} parent=53 // pred_check_branch
        %290 = sbr.rel (%p288) target = $region58
      $region57: #{mixa_module.1} parent=53 // pred_region
        %p291 = scmp.lt.s32.totalorder %s16, 1
        %s292 = scalar_select %p291, %s16, 1
        %s293 = smul.addr %s292, 4
        %s294 = smul.addr %s293, 2
        %s295 = scalar_lea.vmem %s2, %s294
      $region58: #{mixa_module.1} parent=53 // pred_fallthru
        _
      // Predicated region
      $region59: #{mixa_module.1} parent=53 // pred_check
        %p296 = pneg %p117
      $region60: #{mixa_module.1} parent=53 // pred_check_branch
        %298 = sbr.rel (%p296) target = $region62
      $region61: #{mixa_module.1} parent=53 // pred_region
        %p299 = scmp.lt.s32.totalorder %s16, 1
        %s300 = scalar_select %p299, %s16, 1
        %s301 = smul.addr %s300, 2
        %s302 = scalar_lea.vmem %s3, %s301
      $region62: #{mixa_module.1} parent=53 // pred_fallthru
        _
    $region54: #{mixa_module.1} parent=5 // pred_fallthru
      _
  $region6: #{mixa_module.1} parent=0 // loop_footer
    %s14 = sadd.s32 1, %s10
  $region7: #{mixa_module.1} parent=0 // loop_footer_branch
    %9 = sbr.rel target = $region3
  $region8: #{mixa_module.1} parent=0 // loop_exit
    _

</llo_original>
